<compile_context>
chip_gen: v6e
topology: v6e:2x2x1
jax: 0.10.0
libtpu: 0.0.40
codegen_flags: <defaults>
</compile_context>

<pallas_src>
import functools
import math

import jax
import jax.numpy as jnp
from jax.experimental import pallas as pl
from jax.experimental.pallas import tpu as pltpu

_INV_SQRT2 = 0.7071067811865476


def _round_up(n: int, m: int) -> int:
    return ((n + m - 1) // m) * m


# --------------------------------------------------------------------------- #
# Kernel helpers
# --------------------------------------------------------------------------- #
def _layer_norm_f32(x_f32, gamma_f32, beta_f32, *, eps, d_model, needs_mask):
    """LayerNorm over the (possibly lane-padded) last dim; padded cols are zero."""
    inv_d = 1.0 / d_model
    mu = jnp.sum(x_f32, axis=-1, keepdims=True) * inv_d
    xc = x_f32 - mu
    if needs_mask:
        lane = jax.lax.broadcasted_iota(jnp.int32, (1, x_f32.shape[-1]), 1)
        xc = xc * (lane < d_model).astype(jnp.float32)
    var = jnp.sum(xc * xc, axis=-1, keepdims=True) * inv_d
    return xc * jax.lax.rsqrt(var + eps) * gamma_f32 + beta_f32


def _gelu_erf(h_f32):
    # exact erf GELU (matches nn.GELU() default)
    return 0.5 * h_f32 * (1.0 + jax.lax.erf(h_f32 * _INV_SQRT2))


# --------------------------------------------------------------------------- #
# Path A kernel: weights VMEM-resident, 1-D grid over row tiles
# --------------------------------------------------------------------------- #
def _ffn_resident_kernel(x_ref, gamma_ref, beta_ref, w1_ref, b1_ref, w2_ref,
                         b2_ref, o_ref, *, eps, d_model, needs_mask):
    x = x_ref[...].astype(jnp.float32)
    y = _layer_norm_f32(x, gamma_ref[...].astype(jnp.float32),
                        beta_ref[...].astype(jnp.float32),
                        eps=eps, d_model=d_model, needs_mask=needs_mask)
    h = jnp.dot(y.astype(w1_ref.dtype), w1_ref[...],
                preferred_element_type=jnp.float32)
    h = _gelu_erf(h + b1_ref[...].astype(jnp.float32))
    # TODO(synk): dropout omitted (inference semantics); training-mode dropout
    # would need pltpu.prng_seed / prng_random_bits keyed per call.
    out = jnp.dot(h.astype(w2_ref.dtype), w2_ref[...],
                  preferred_element_type=jnp.float32)
    out = out + b2_ref[...].astype(jnp.float32) + x
    o_ref[...] = out.astype(o_ref.dtype)


# --------------------------------------------------------------------------- #
# Path B kernel: d_ff-streamed reduction, 2-D (row tiles x d_ff tiles) grid
# --------------------------------------------------------------------------- #
def _ffn_stream_kernel(x_ref, gamma_ref, beta_ref, w1_ref, b1_ref, w2_ref,
                       b2_ref, o_ref, acc_ref, y_ref, *, eps, d_model,
                       needs_mask):
    k = pl.program_id(1)

    @pl.when(k == 0)
    def _init():
        x = x_ref[...].astype(jnp.float32)
        y = _layer_norm_f32(x, gamma_ref[...].astype(jnp.float32),
                            beta_ref[...].astype(jnp.float32),
                            eps=eps, d_model=d_model, needs_mask=needs_mask)
        y_ref[...] = y.astype(y_ref.dtype)            # LN output, reused every k
        # Seed accumulator with residual + output bias -> finalize is just a cast.
        acc_ref[...] = x + b2_ref[...].astype(jnp.float32)

    h = jnp.dot(y_ref[...], w1_ref[...], preferred_element_type=jnp.float32)
    h = _gelu_erf(h + b1_ref[...].astype(jnp.float32))
    # TODO(synk): dropout omitted (inference semantics).
    acc_ref[...] += jnp.dot(h.astype(w2_ref.dtype), w2_ref[...],
                            preferred_element_type=jnp.float32)

    @pl.when(k == pl.num_programs(1) - 1)
    def _finalize():
        o_ref[...] = acc_ref[...].astype(o_ref.dtype)


# --------------------------------------------------------------------------- #
# Wrapper
# --------------------------------------------------------------------------- #
def _chip_info():
    """(vmem_capacity_bytes, streaming tile_m, streaming tile_ff) per generation."""
    kind = ""
    try:
        kind = jax.devices()[0].device_kind.lower()
    except Exception:
        pass
    cap = None
    try:
        cap = int(pltpu.get_tpu_info().vmem_capacity_bytes)
    except Exception:
        cap = None
    if cap is None or cap <= 0:
        cap = (128 << 20) if ("v5" in kind or "v6" in kind) else (64 << 20)
    if "v6" in kind:
        tm, tff = 768, 1024        # v6e: balance ~650 tokens / weight pass
    elif "v5" in kind:
        tm, tff = 384, 1024        # v5e: balance ~240; fewer k-steps is the lever
    else:
        tm, tff = 512, 512         # v7x (and unknown): balance ~310, 64 MiB VMEM
    return cap, tm, tff


def _spec(shape, index_map, buffers=None):
    """BlockSpec with optional pipeline_mode=Buffered(n), falling back gracefully."""
    if buffers is not None and hasattr(pl, "Buffered"):
        try:
            return pl.BlockSpec(shape, index_map,
                                pipeline_mode=pl.Buffered(buffers))
        except TypeError:          # older jax without the pipeline_mode kwarg
            pass
    return pl.BlockSpec(shape, index_map)


def residual_feedforward(x, gamma, beta, w1, b1, w2, b2, *,
                         eps: float = 1e-5,
                         tile_m=None,
                         tile_ff=None,
                         compute_dtype=jnp.bfloat16,
                         force_streaming: bool = False):
    """x: (batch, seq, d_model).  Weights stored as (in, out) = PyTorch W.T."""
    B, S, D = x.shape
    Dff = w1.shape[1]
    N = B * S

    xbytes = x.dtype.itemsize
    wbytes = jnp.dtype(compute_dtype).itemsize
    row_align = 16 if wbytes == 2 else 8      # bf16 packs 2 rows / sublane

    Dp = _round_up(D, 128)
    needs_mask = (Dp != D)

    cap, tm_stream, tff_stream = _chip_info()
    vmem_limit = max(32 << 20, min(int(cap * 0.85), cap - (2 << 20)))
    small_vmem = cap <= (96 << 20)            # v7x-class budget
    cap_tokens = _round_up(N, row_align)

    # -------- Path A check: do W1 + W2 (padded, incl. pipeline buffers) fit? ----
    Dffp = _round_up(Dff, 128)
    weight_vmem = 2 * (2 * Dp * Dffp * wbytes)

    def _resident_act_bytes(tm_):
        return (2 * tm_ * Dp * xbytes              # x tile (double-buffered)
                + 2 * tm_ * Dp * xbytes            # out tile (double-buffered)
                + 4 * tm_ * Dp * 4                 # f32 temporaries (x, xc, y, out)
                + tm_ * Dp * wbytes                # y in compute dtype
                + tm_ * Dffp * (4 + wbytes))       # h in f32 + compute dtype

    if tile_m is not None:
        cand_tms = [_round_up(min(tile_m, cap_tokens), row_align)]
    else:
        cand_tms = sorted({min(c, cap_tokens)
                           for c in (1024, 768, 512, 384, 256, 128, row_align)},
                          reverse=True)

    resident_tm = None
    if not force_streaming:
        for cand in cand_tms:
            if weight_vmem + _resident_act_bytes(cand) + (4 << 20) <= vmem_limit:
                resident_tm = cand
                break

    # ========================= Path A: resident weights ========================
    if resident_tm is not None:
        tm = resident_tm
        Np = _round_up(N, tm)

        x2 = jnp.pad(x.reshape(N, D), ((0, Np - N), (0, Dp - D)))
        gamma2 = jnp.pad(gamma, (0, Dp - D)).reshape(1, Dp)
        beta2 = jnp.pad(beta, (0, Dp - D)).reshape(1, Dp)
        w1p = jnp.pad(w1, ((0, Dp - D), (0, Dffp - Dff))).astype(compute_dtype)
        b1p = jnp.pad(b1, (0, Dffp - Dff)).reshape(1, Dffp)
        w2p = jnp.pad(w2, ((0, Dffp - Dff), (0, Dp - D))).astype(compute_dtype)
        b2p = jnp.pad(b2, (0, Dp - D)).reshape(1, Dp)

        cost = pl.CostEstimate(
            flops=4 * N * D * Dff,
            transcendentals=N * Dff,
            bytes_accessed=(2 * N * D * xbytes
                            + (w1p.size + w2p.size) * wbytes     # weights read once
                            + (gamma2.size + beta2.size + b1p.size + b2p.size) * 4))

        out = pl.pallas_call(
            functools.partial(_ffn_resident_kernel, eps=eps, d_model=D,
                              needs_mask=needs_mask),
            out_shape=jax.ShapeDtypeStruct((Np, Dp), x.dtype),
            grid_spec=pltpu.PrefetchScalarGridSpec(
                num_scalar_prefetch=0,
                grid=(Np // tm,),
                in_specs=[
                    pl.BlockSpec((tm, Dp),   lambda i: (i, 0)),   # x row tile
                    pl.BlockSpec((1, Dp),    lambda i: (0, 0)),   # gamma
                    pl.BlockSpec((1, Dp),    lambda i: (0, 0)),   # beta
                    pl.BlockSpec((Dp, Dffp), lambda i: (0, 0)),   # W1 (resident)
                    pl.BlockSpec((1, Dffp),  lambda i: (0, 0)),   # b1
                    pl.BlockSpec((Dffp, Dp), lambda i: (0, 0)),   # W2 (resident)
                    pl.BlockSpec((1, Dp),    lambda i: (0, 0)),   # b2
                ],
                out_specs=pl.BlockSpec((tm, Dp), lambda i: (i, 0)),
            ),
            compiler_params=pltpu.CompilerParams(
                dimension_semantics=("parallel",),
                vmem_limit_bytes=vmem_limit),
            cost_estimate=cost,
        )(x2, gamma2, beta2, w1p, b1p, w2p, b2p)

        return out[:N, :D].reshape(B, S, D)

    # ========================= Path B: streamed weights ========================
    tm = _round_up(min(tile_m if tile_m is not None else tm_stream, cap_tokens),
                   row_align)
    tff = _round_up(min(tile_ff if tile_ff is not None else tff_stream, Dffp), 128)

    def _stream_bytes(tm_, tff_):
        io_bufs = 1 if small_vmem else 2     # Buffered(1) on x/out where VMEM is tight
        return (2 * io_bufs * tm_ * Dp * xbytes          # x + out tiles
                + 4 * Dp * tff_ * wbytes                 # W1+W2 tiles, double-buffered
                + tm_ * Dp * 4                           # f32 accumulator scratch
                + tm_ * Dp * wbytes                      # cached LayerNorm output
                + 3 * tm_ * Dp * 4                       # LN f32 temporaries
                + tm_ * tff_ * (4 + wbytes))             # h in f32 + compute dtype

    while (_stream_bytes(tm, tff) + (4 << 20) > vmem_limit
           and (tm > row_align or tff > 128)):
        if tff > 128 and (tff >= tm or tm <= row_align):
            tff = max(128, tff // 2)
        else:
            tm = max(row_align, _round_up(tm // 2, row_align))

    Np = _round_up(N, tm)
    Dffp = _round_up(Dff, tff)

    x2 = jnp.pad(x.reshape(N, D), ((0, Np - N), (0, Dp - D)))
    gamma2 = jnp.pad(gamma, (0, Dp - D)).reshape(1, Dp)
    beta2 = jnp.pad(beta, (0, Dp - D)).reshape(1, Dp)
    w1p = jnp.pad(w1, ((0, Dp - D), (0, Dffp - Dff))).astype(compute_dtype)
    b1p = jnp.pad(b1, (0, Dffp - Dff)).reshape(1, Dffp)
    w2p = jnp.pad(w2, ((0, Dffp - Dff), (0, Dp - D))).astype(compute_dtype)
    b2p = jnp.pad(b2, (0, Dp - D)).reshape(1, Dp)

    grid = (Np // tm, Dffp // tff)
    n_row_tiles = grid[0]

    cost = pl.CostEstimate(
        flops=4 * N * D * Dff,
        transcendentals=N * Dff,
        bytes_accessed=(2 * N * D * xbytes
                        # weights are re-streamed once per row tile:
                        + n_row_tiles * (w1p.size + w2p.size) * wbytes
                        + (gamma2.size + beta2.size + b1p.size + b2p.size) * 4))

    io_buffers = 1 if small_vmem else None    # k-invariant x/out: single buffer on v7x

    def _call(use_buffered):
        bufs = io_buffers if use_buffered else None
        return pl.pallas_call(
            functools.partial(_ffn_stream_kernel, eps=eps, d_model=D,
                              needs_mask=needs_mask),
            out_shape=jax.ShapeDtypeStruct((Np, Dp), x.dtype),
            grid_spec=pltpu.PrefetchScalarGridSpec(
                num_scalar_prefetch=0,
                grid=grid,
                in_specs=[
                    _spec((tm, Dp),  lambda i, k: (i, 0), bufs),   # x row tile
                    pl.BlockSpec((1, Dp),   lambda i, k: (0, 0)),  # gamma
                    pl.BlockSpec((1, Dp),   lambda i, k: (0, 0)),  # beta
                    pl.BlockSpec((Dp, tff), lambda i, k: (0, k)),  # W1 column tile
                    pl.BlockSpec((1, tff),  lambda i, k: (0, k)),  # b1 tile
                    pl.BlockSpec((tff, Dp), lambda i, k: (k, 0)),  # W2 row tile
                    pl.BlockSpec((1, Dp),   lambda i, k: (0, 0)),  # b2
                ],
                out_specs=_spec((tm, Dp), lambda i, k: (i, 0), bufs),
                scratch_shapes=[
                    pltpu.VMEM((tm, Dp), jnp.float32),     # f32 accumulator
                    pltpu.VMEM((tm, Dp), compute_dtype),   # cached LayerNorm output
                ],
            ),
            compiler_params=pltpu.CompilerParams(
                dimension_semantics=("parallel", "arbitrary"),
                vmem_limit_bytes=vmem_limit),
            cost_estimate=cost,
        )(x2, gamma2, beta2, w1p, b1p, w2p, b2p)

    if io_buffers is not None:
        try:
            out = _call(True)
        except Exception:
            out = _call(False)    # fall back if Buffered(1) is unsupported here
    else:
        out = _call(False)

    return out[:N, :D].reshape(B, S, D)


# --------------------------------------------------------------------------- #
# Init + references + self-test
# --------------------------------------------------------------------------- #
def init_params(key, d_model: int, expansion: int = 4):
    """Deterministic init matching nn.Linear default ranges (uniform +-1/sqrt(fan_in))."""
    d_ff = d_model * expansion
    k1, k2, k3, k4 = jax.random.split(key, 4)
    lim1 = 1.0 / math.sqrt(d_model)
    lim2 = 1.0 / math.sqrt(d_ff)
    gamma = jnp.ones((d_model,), jnp.float32)       # LayerNorm weight
    beta = jnp.zeros((d_model,), jnp.float32)       # LayerNorm bias
    # stored as (in, out) = PyTorch weight transposed
    w1 = jax.random.uniform(k1, (d_model, d_ff), jnp.float32, -lim1, lim1)
    b1 = jax.random.uniform(k2, (d_ff,), jnp.float32, -lim1, lim1)
    w2 = jax.random.uniform(k3, (d_ff, d_model), jnp.float32, -lim2, lim2)
    b2 = jax.random.uniform(k4, (d_model,), jnp.float32, -lim2, lim2)
    return gamma, beta, w1, b1, w2, b2


def _reference_f32(x, gamma, beta, w1, b1, w2, b2, eps=1e-5):
    mu = jnp.mean(x, axis=-1, keepdims=True)
    var = jnp.mean((x - mu) ** 2, axis=-1, keepdims=True)
    y = (x - mu) * jax.lax.rsqrt(var + eps) * gamma + beta
    h = jnp.dot(y, w1) + b1
    h = 0.5 * h * (1.0 + jax.lax.erf(h * _INV_SQRT2))
    return x + jnp.dot(h, w2) + b2


def _reference_bf16(x, gamma, beta, w1, b1, w2, b2, eps=1e-5):
    """Same math as the kernel (bf16 matmul inputs, f32 accumulate / LN / GELU)."""
    mu = jnp.mean(x, axis=-1, keepdims=True)
    var = jnp.mean((x - mu) ** 2, axis=-1, keepdims=True)
    y = (x - mu) * jax.lax.rsqrt(var + eps) * gamma + beta
    h = jnp.dot(y.astype(jnp.bfloat16), w1.astype(jnp.bfloat16),
                preferred_element_type=jnp.float32) + b1
    h = 0.5 * h * (1.0 + jax.lax.erf(h * _INV_SQRT2))
    return x + jnp.dot(h.astype(jnp.bfloat16), w2.astype(jnp.bfloat16),
                       preferred_element_type=jnp.float32) + b2


if __name__ == "__main__":
    key = jax.random.PRNGKey(0)
    kx, kp, kx2, kp2 = jax.random.split(key, 4)

    # ---- main test: small shapes, VMEM-resident weight path ----
    batch, seq, d_model, expansion = 2, 8, 32, 4
    x = jax.random.normal(kx, (batch, seq, d_model), jnp.float32)
    params = init_params(kp, d_model, expansion)

    out = jax.block_until_ready(residual_feedforward(x, *params))
    assert out.shape == x.shape and out.dtype == x.dtype

    ref_bf16 = _reference_bf16(x, *params)
    assert jnp.allclose(out, ref_bf16, atol=5e-3, rtol=5e-3), \
        "mismatch vs bf16-matched reference"
    ref_f32 = _reference_f32(x, *params)
    assert jnp.allclose(out, ref_f32, atol=5e-2, rtol=5e-2), \
        "mismatch vs f32 reference"

    # ---- multi-row-tile resident path (explicit small tile_m) ----
    xb = jax.random.normal(kx2, (2, 40, d_model), jnp.float32)
    out_b = jax.block_until_ready(residual_feedforward(xb, *params, tile_m=16))
    assert jnp.allclose(out_b, _reference_bf16(xb, *params), atol=5e-3, rtol=5e-3), \
        "mismatch on multi-row-tile resident path"

    # ---- streaming (weight-tiled) fallback path, multiple d_ff steps ----
    d_model2 = 64
    params2 = init_params(kp2, d_model2, expansion)
    xc = jax.random.normal(kx, (2, 24, d_model2), jnp.float32)
    out_c = jax.block_until_ready(
        residual_feedforward(xc, *params2, tile_m=16, tile_ff=128,
                             force_streaming=True))
    assert jnp.allclose(out_c, _reference_bf16(xc, *params2), atol=5e-3, rtol=5e-3), \
        "mismatch on streaming path"

    print("KERNEL_OK")
</pallas_src>

<mosaic_0001>
module attributes {stable_mosaic.version = 11 : i64} {
  func.func @_ffn_resident_kernel(%arg0: i32, %arg1: memref<16x128xf32, #tpu.memory_space<vmem>>, %arg2: memref<1x128xf32, #tpu.memory_space<vmem>>, %arg3: memref<1x128xf32, #tpu.memory_space<vmem>>, %arg4: memref<128x128xbf16, #tpu.memory_space<vmem>>, %arg5: memref<1x128xf32, #tpu.memory_space<vmem>>, %arg6: memref<128x128xbf16, #tpu.memory_space<vmem>>, %arg7: memref<1x128xf32, #tpu.memory_space<vmem>>, %arg8: memref<16x128xf32, #tpu.memory_space<vmem>>) attributes {dimension_semantics = [#tpu.dimension_semantics<parallel>], iteration_bounds = array<i64: 1>, scalar_prefetch = 0 : i64, scratch_operands = 0 : i64, tpu.core_type = #tpu.core_type<tc>, window_params = [{transform_indices = @transform_0, window_bounds = array<i64: 16, 128>}, {pipeline_mode = #tpu.pipeline_mode<synchronous>, transform_indices = @transform_1, window_bounds = array<i64: 1, 128>}, {pipeline_mode = #tpu.pipeline_mode<synchronous>, transform_indices = @transform_2, window_bounds = array<i64: 1, 128>}, {pipeline_mode = #tpu.pipeline_mode<synchronous>, transform_indices = @transform_3, window_bounds = array<i64: 128, 128>}, {pipeline_mode = #tpu.pipeline_mode<synchronous>, transform_indices = @transform_4, window_bounds = array<i64: 1, 128>}, {pipeline_mode = #tpu.pipeline_mode<synchronous>, transform_indices = @transform_5, window_bounds = array<i64: 128, 128>}, {pipeline_mode = #tpu.pipeline_mode<synchronous>, transform_indices = @transform_6, window_bounds = array<i64: 1, 128>}, {transform_indices = @transform_7, window_bounds = array<i64: 16, 128>}]} {
    %c0 = arith.constant 0 : index
    %c0_0 = arith.constant 0 : index
    %0 = vector.load %arg1[%c0, %c0_0] : memref<16x128xf32, #tpu.memory_space<vmem>>, vector<16x128xf32>
    %c0_1 = arith.constant 0 : index
    %c0_2 = arith.constant 0 : index
    %1 = vector.load %arg2[%c0_1, %c0_2] : memref<1x128xf32, #tpu.memory_space<vmem>>, vector<1x128xf32>
    %c0_3 = arith.constant 0 : index
    %c0_4 = arith.constant 0 : index
    %2 = vector.load %arg3[%c0_3, %c0_4] : memref<1x128xf32, #tpu.memory_space<vmem>>, vector<1x128xf32>
    %cst = arith.constant dense<0.000000e+00> : vector<16xf32>
    %3 = vector.multi_reduction <add>, %0, %cst [1] : vector<16x128xf32> to vector<16xf32>
    %4 = vector.shape_cast %3 : vector<16xf32> to vector<16x1xf32>
    %cst_5 = arith.constant 3.125000e-02 : f32
    %5 = vector.broadcast %cst_5 : f32 to vector<16x1xf32>
    %6 = arith.mulf %4, %5 : vector<16x1xf32>
    %7 = vector.broadcast %6 : vector<16x1xf32> to vector<16x128xf32>
    %8 = arith.subf %0, %7 : vector<16x128xf32>
    %9 = tpu.iota {dimensions = array<i32: 1>} : vector<1x128xi32>
    %c32_i32 = arith.constant 32 : i32
    %10 = vector.broadcast %c32_i32 : i32 to vector<1x128xi32>
    %11 = arith.cmpi slt, %9, %10 : vector<1x128xi32>
    %12 = arith.extui %11 : vector<1x128xi1> to vector<1x128xi32>
    %13 = arith.sitofp %12 : vector<1x128xi32> to vector<1x128xf32>
    %14 = vector.broadcast %13 : vector<1x128xf32> to vector<16x128xf32>
    %15 = arith.mulf %8, %14 : vector<16x128xf32>
    %16 = arith.mulf %15, %15 : vector<16x128xf32>
    %cst_6 = arith.constant dense<0.000000e+00> : vector<16xf32>
    %17 = vector.multi_reduction <add>, %16, %cst_6 [1] : vector<16x128xf32> to vector<16xf32>
    %18 = vector.shape_cast %17 : vector<16xf32> to vector<16x1xf32>
    %cst_7 = arith.constant 3.125000e-02 : f32
    %19 = vector.broadcast %cst_7 : f32 to vector<16x1xf32>
    %20 = arith.mulf %18, %19 : vector<16x1xf32>
    %cst_8 = arith.constant 9.99999974E-6 : f32
    %21 = vector.broadcast %cst_8 : f32 to vector<16x1xf32>
    %22 = arith.addf %20, %21 : vector<16x1xf32>
    %23 = math.rsqrt %22 : vector<16x1xf32>
    %24 = vector.broadcast %23 : vector<16x1xf32> to vector<16x128xf32>
    %25 = arith.mulf %15, %24 : vector<16x128xf32>
    %26 = vector.broadcast %1 : vector<1x128xf32> to vector<16x128xf32>
    %27 = arith.mulf %25, %26 : vector<16x128xf32>
    %28 = vector.broadcast %2 : vector<1x128xf32> to vector<16x128xf32>
    %29 = arith.addf %27, %28 : vector<16x128xf32>
    %30 = arith.truncf %29 : vector<16x128xf32> to vector<16x128xbf16>
    %c0_9 = arith.constant 0 : index
    %c0_10 = arith.constant 0 : index
    %31 = vector.load %arg4[%c0_9, %c0_10] : memref<128x128xbf16, #tpu.memory_space<vmem>>, vector<128x128xbf16>
    %cst_11 = arith.constant dense<0.000000e+00> : vector<16x128xf32>
    %32 = tpu.matmul %30, %31, %cst_11 {dimension_numbers = #tpu.dot_dimension_numbers<[1], [0], [0], [1], [0, 0, 1, 1], [], []>} : vector<16x128xbf16>, vector<128x128xbf16>, vector<16x128xf32> -> vector<16x128xf32>
    %c0_12 = arith.constant 0 : index
    %c0_13 = arith.constant 0 : index
    %33 = vector.load %arg5[%c0_12, %c0_13] : memref<1x128xf32, #tpu.memory_space<vmem>>, vector<1x128xf32>
    %34 = vector.broadcast %33 : vector<1x128xf32> to vector<16x128xf32>
    %35 = arith.addf %32, %34 : vector<16x128xf32>
    %cst_14 = arith.constant 5.000000e-01 : f32
    %36 = vector.broadcast %cst_14 : f32 to vector<16x128xf32>
    %37 = arith.mulf %36, %35 : vector<16x128xf32>
    %cst_15 = arith.constant 0.707106769 : f32
    %38 = vector.broadcast %cst_15 : f32 to vector<16x128xf32>
    %39 = arith.mulf %35, %38 : vector<16x128xf32>
    %40 = math.erf %39 : vector<16x128xf32>
    %cst_16 = arith.constant 1.000000e+00 : f32
    %41 = vector.broadcast %cst_16 : f32 to vector<16x128xf32>
    %42 = arith.addf %41, %40 : vector<16x128xf32>
    %43 = arith.mulf %37, %42 : vector<16x128xf32>
    %44 = arith.truncf %43 : vector<16x128xf32> to vector<16x128xbf16>
    %c0_17 = arith.constant 0 : index
    %c0_18 = arith.constant 0 : index
    %45 = vector.load %arg6[%c0_17, %c0_18] : memref<128x128xbf16, #tpu.memory_space<vmem>>, vector<128x128xbf16>
    %cst_19 = arith.constant dense<0.000000e+00> : vector<16x128xf32>
    %46 = tpu.matmul %44, %45, %cst_19 {dimension_numbers = #tpu.dot_dimension_numbers<[1], [0], [0], [1], [0, 0, 1, 1], [], []>} : vector<16x128xbf16>, vector<128x128xbf16>, vector<16x128xf32> -> vector<16x128xf32>
    %c0_20 = arith.constant 0 : index
    %c0_21 = arith.constant 0 : index
    %47 = vector.load %arg7[%c0_20, %c0_21] : memref<1x128xf32, #tpu.memory_space<vmem>>, vector<1x128xf32>
    %48 = vector.broadcast %47 : vector<1x128xf32> to vector<16x128xf32>
    %49 = arith.addf %46, %48 : vector<16x128xf32>
    %50 = arith.addf %49, %0 : vector<16x128xf32>
    %c0_22 = arith.constant 0 : index
    %c0_23 = arith.constant 0 : index
    %51 = vector.load %arg8[%c0_22, %c0_23] : memref<16x128xf32, #tpu.memory_space<vmem>>, vector<16x128xf32>
    tpu.vector_store %arg8[%c0_22, %c0_23], %50 {strides = array<i32>} : memref<16x128xf32, #tpu.memory_space<vmem>>, vector<16x128xf32>,
    return
  }
  func.func @transform_0(%arg0: i32) -> (i32, i32) {
    %c0_i32 = arith.constant 0 : i32
    %c0_i32_0 = arith.constant 0 : i32
    return %arg0, %c0_i32 : i32, i32
  }
  func.func @transform_1(%arg0: i32) -> (i32, i32) {
    %c0_i32 = arith.constant 0 : i32
    %c0_i32_0 = arith.constant 0 : i32
    %c0_i32_1 = arith.constant 0 : i32
    return %c0_i32, %c0_i32_0 : i32, i32
  }
  func.func @transform_2(%arg0: i32) -> (i32, i32) {
    %c0_i32 = arith.constant 0 : i32
    %c0_i32_0 = arith.constant 0 : i32
    %c0_i32_1 = arith.constant 0 : i32
    return %c0_i32, %c0_i32_0 : i32, i32
  }
  func.func @transform_3(%arg0: i32) -> (i32, i32) {
    %c0_i32 = arith.constant 0 : i32
    %c0_i32_0 = arith.constant 0 : i32
    %c0_i32_1 = arith.constant 0 : i32
    return %c0_i32, %c0_i32_0 : i32, i32
  }
  func.func @transform_4(%arg0: i32) -> (i32, i32) {
    %c0_i32 = arith.constant 0 : i32
    %c0_i32_0 = arith.constant 0 : i32
    %c0_i32_1 = arith.constant 0 : i32
    return %c0_i32, %c0_i32_0 : i32, i32
  }
  func.func @transform_5(%arg0: i32) -> (i32, i32) {
    %c0_i32 = arith.constant 0 : i32
    %c0_i32_0 = arith.constant 0 : i32
    %c0_i32_1 = arith.constant 0 : i32
    return %c0_i32, %c0_i32_0 : i32, i32
  }
  func.func @transform_6(%arg0: i32) -> (i32, i32) {
    %c0_i32 = arith.constant 0 : i32
    %c0_i32_0 = arith.constant 0 : i32
    %c0_i32_1 = arith.constant 0 : i32
    return %c0_i32, %c0_i32_0 : i32, i32
  }
  func.func @transform_7(%arg0: i32) -> (i32, i32) {
    %c0_i32 = arith.constant 0 : i32
    %c0_i32_0 = arith.constant 0 : i32
    return %arg0, %c0_i32 : i32, i32
  }
}

</mosaic_0001>

<llo_original>
// kernel: tpu_custom_call.1
$region0: #{tpu_custom_call.1}
  #allocation0 [shape = 'u32[]', space=smem, size = 0x4, offset = 0x4, fixed_abs, tag = 'smem constant byte address 0x4 - core index']
  #allocation1 [shape = 'u32[144,128]{1,0:T(1,128)}', space=vmem, size = 0x12000, scoped, tag = 'internal scratch']
  %s0 = inlined_call_operand.hbm [shape: f32[16,128], index: 0, kind: input, shape index: {}]
  %s1 = inlined_call_operand.vmem [shape: f32[1,128], index: 1, kind: input, shape index: {}]
  %s2 = inlined_call_operand.vmem [shape: f32[1,128], index: 2, kind: input, shape index: {}]
  %s3 = inlined_call_operand.hbm [shape: bf16[128,128], index: 3, kind: input, shape index: {}]
  %s4 = inlined_call_operand.vmem [shape: f32[1,128], index: 4, kind: input, shape index: {}]
  %s5 = inlined_call_operand.hbm [shape: bf16[128,128], index: 5, kind: input, shape index: {}]
  %s6 = inlined_call_operand.vmem [shape: f32[1,128], index: 6, kind: input, shape index: {}]
  %s7 = inlined_call_operand.hbm [shape: f32[16,128], index: 7, kind: output, shape index: {}]
  %s8 = sld [smem:[#allocation0]]
  $region50: #{tpu_custom_call.1} parent=0
    _
  %s10 = ssub.s32 1, %s8
  %s11 = scalar_select 0, %s10, %s8
  $region1: #{tpu_custom_call.1} parent=0
    #allocation2 [shape = 'u8[8192]{0}', space=vmem, size = 0x2000, scoped, tag = 'input window, operand 0, single buffered']
    #allocation3 [shape = 's32[1]{0}', space=sflag, size = 0x4, scoped, tag = 'scoped memory for tpu_custom_call.1']
    #allocation4 [shape = 's32[1]{0}', space=sflag, size = 0x4, scoped, tag = 'scoped memory for tpu_custom_call.1']
    #allocation5 [shape = 'u8[32768]{0}', space=vmem, size = 0x8000, scoped, tag = 'input window, operand 3, single buffered']
    #allocation6 [shape = 's32[1]{0}', space=sflag, size = 0x4, scoped, tag = 'scoped memory for tpu_custom_call.1']
    #allocation7 [shape = 'u8[32768]{0}', space=vmem, size = 0x8000, scoped, tag = 'input window, operand 5, single buffered']
    #allocation8 [shape = 'u8[8192]{0}', space=vmem, size = 0x2000, scoped, tag = 'output window, operand 0, single buffered']
    %12 = vsyncpa [#allocation3], 0
    %13 = vsyncpa [#allocation6], 0
    %14 = vsyncpa [#allocation4], 0
    // Predicated region
    $region2: #{tpu_custom_call.1} parent=1 // pred_check
      _
    $region3: #{tpu_custom_call.1} parent=1 // pred_check_branch
      %16 = sbr.rel (0) target = $region5
    $region4: #{tpu_custom_call.1} parent=1 // pred_region
      %s18 = ssub.s32 256, 256
      %19 = vsyncadd [#allocation3], %s18
      %s20 = sshll.u32 [#allocation2], 4
      %s21 = int_to_ptr.vmem [resolvable:$true] %s20
      %26 = dma.hbm_to_vmem [thread:$0]  %s0, 256, %s21, [#allocation3], 128, 128, 8
    $region5: #{tpu_custom_call.1} parent=1 // pred_fallthru
      _
    // Predicated region
    $region6: #{tpu_custom_call.1} parent=1 // pred_check
      _
    $region7: #{tpu_custom_call.1} parent=1 // pred_check_branch
      %28 = sbr.rel (0) target = $region9
    $region8: #{tpu_custom_call.1} parent=1 // pred_region
      _
    $region9: #{tpu_custom_call.1} parent=1 // pred_fallthru
      _
    // Predicated region
    $region10: #{tpu_custom_call.1} parent=1 // pred_check
      _
    $region11: #{tpu_custom_call.1} parent=1 // pred_check_branch
      %30 = sbr.rel (0) target = $region13
    $region12: #{tpu_custom_call.1} parent=1 // pred_region
      _
    $region13: #{tpu_custom_call.1} parent=1 // pred_fallthru
      _
    // Predicated region
    $region14: #{tpu_custom_call.1} parent=1 // pred_check
      _
    $region15: #{tpu_custom_call.1} parent=1 // pred_check_branch
      %32 = sbr.rel (0) target = $region17
    $region16: #{tpu_custom_call.1} parent=1 // pred_region
      %s34 = ssub.s32 1024, 1024
      %35 = vsyncadd [#allocation6], %s34
      %s36 = sshll.u32 [#allocation5], 4
      %s37 = int_to_ptr.vmem [resolvable:$true] %s36
      %42 = dma.hbm_to_vmem [thread:$0]  %s3, 1024, %s37, [#allocation6], 64, 64, 4
    $region17: #{tpu_custom_call.1} parent=1 // pred_fallthru
      _
    // Predicated region
    $region18: #{tpu_custom_call.1} parent=1 // pred_check
      _
    $region19: #{tpu_custom_call.1} parent=1 // pred_check_branch
      %44 = sbr.rel (0) target = $region21
    $region20: #{tpu_custom_call.1} parent=1 // pred_region
      _
    $region21: #{tpu_custom_call.1} parent=1 // pred_fallthru
      _
    // Predicated region
    $region22: #{tpu_custom_call.1} parent=1 // pred_check
      _
    $region23: #{tpu_custom_call.1} parent=1 // pred_check_branch
      %46 = sbr.rel (0) target = $region25
    $region24: #{tpu_custom_call.1} parent=1 // pred_region
      %s48 = ssub.s32 1024, 1024
      %49 = vsyncadd [#allocation6], %s48
      %s50 = sshll.u32 [#allocation7], 4
      %s51 = int_to_ptr.vmem [resolvable:$true] %s50
      %56 = dma.hbm_to_vmem [thread:$0]  %s5, 1024, %s51, [#allocation6], 64, 64, 4
    $region25: #{tpu_custom_call.1} parent=1 // pred_fallthru
      _
    // Predicated region
    $region26: #{tpu_custom_call.1} parent=1 // pred_check
      _
    $region27: #{tpu_custom_call.1} parent=1 // pred_check_branch
      %58 = sbr.rel (0) target = $region29
    $region28: #{tpu_custom_call.1} parent=1 // pred_region
      _
    $region29: #{tpu_custom_call.1} parent=1 // pred_fallthru
      _
    // Predicated region
    $region30: #{tpu_custom_call.1} parent=1 // pred_check
      _
    $region31: #{tpu_custom_call.1} parent=1 // pred_check_branch
      %60 = sbr.rel (0) target = $region33
    $region32: #{tpu_custom_call.1} parent=1 // pred_region
      %61 = dma.done [#allocation3], 256
    $region33: #{tpu_custom_call.1} parent=1 // pred_fallthru
      _
    // Predicated region
    $region34: #{tpu_custom_call.1} parent=1 // pred_check
      _
    $region35: #{tpu_custom_call.1} parent=1 // pred_check_branch
      %63 = sbr.rel (0) target = $region37
    $region36: #{tpu_custom_call.1} parent=1 // pred_region
      %64 = dma.done [#allocation6], 1024
    $region37: #{tpu_custom_call.1} parent=1 // pred_fallthru
      _
    // Predicated region
    $region38: #{tpu_custom_call.1} parent=1 // pred_check
      _
    $region39: #{tpu_custom_call.1} parent=1 // pred_check_branch
      %66 = sbr.rel (0) target = $region41
    $region40: #{tpu_custom_call.1} parent=1 // pred_region
      %67 = dma.done [#allocation6], 1024
    $region41: #{tpu_custom_call.1} parent=1 // pred_fallthru
      _
    %v69 = vld [vmem:[#allocation2] sm:$0xff]
    %v70 = vld [vmem:[#allocation2 + $0x8] sm:$0xff]
    %v71 = vld [vmem:[%s1] sm:$0x1]
    %v72 = vld [vmem:[%s2] sm:$0x1]
    %73 = vadd.xlane.f32.xlu0 %v69
    %v74 = vpop.xlane.xlu0 %73
    %75 = vadd.xlane.f32.xlu0 %v70
    %v76 = vpop.xlane.xlu0 %75
    %v77 = vmul.f32 %v74, 0.03125
    %v78 = vmul.f32 %v76, 0.03125
    %v79 = vsub.f32 %v69, %v77
    %v80 = vsub.f32 %v70, %v78
    %v81 = vlaneseq
    %v82 = vand.u32 %v81, 127
    %vm83 = vcmp.lt.s32.totalorder %v82, 32
    %v84 = vsel %vm83, 1, 0
    %v85 = vcvt.s32.f32 %v84
    %v86 = vmul.f32 %v79, %v85
    %v87 = vmul.f32 %v80, %v85
    %v88 = vmul.f32 %v86, %v86
    %v89 = vmul.f32 %v87, %v87
    %90 = vadd.xlane.f32.xlu0 %v88
    %v91 = vpop.xlane.xlu0 %90
    %92 = vadd.xlane.f32.xlu0 %v89
    %v93 = vpop.xlane.xlu0 %92
    %v94 = vmul.f32 %v91, 0.03125
    %v95 = vmul.f32 %v93, 0.03125
    %v96 = vadd.f32 %v94, 1e-05
    %v97 = vadd.f32 %v95, 1e-05
    %v98 = vrsqrt.pop %v96
    %v99 = vrsqrt.pop %v97
    %v100 = vmul.f32 %v86, %v98
    %v101 = vmul.f32 %v87, %v99
    %v103 = vlaneseq
    %v104 = vshrl.u32 %v103, 7
    %v105 = vsub.s32 0, %v104
    %v106 = vrot.slane %v71, %v105
    %v108 = vmul.f32 %v100, %v106
    %v109 = vmul.f32 %v101, %v106
    %v111 = vlaneseq
    %v112 = vshrl.u32 %v111, 7
    %v113 = vsub.s32 0, %v112
    %v114 = vrot.slane %v72, %v113
    %v116 = vadd.f32 %v108, %v114
    %v117 = vadd.f32 %v109, %v114
    %v118 = vpack.c.bf16 %v117, %v116
    %v119 = vld [vmem:[#allocation5] sm:$0xf]
    %v120 = vld [vmem:[#allocation5 + $0x4] sm:$0xf]
    %v121 = vld [vmem:[#allocation5 + $0x8] sm:$0xf]
    %v122 = vld [vmem:[#allocation5 + $0xc] sm:$0xf]
    %v123 = vld [vmem:[#allocation5 + $0x10] sm:$0xf]
    %v124 = vld [vmem:[#allocation5 + $0x14] sm:$0xf]
    %v125 = vld [vmem:[#allocation5 + $0x18] sm:$0xf]
    %v126 = vld [vmem:[#allocation5 + $0x1c] sm:$0xf]
    %v127 = vld [vmem:[#allocation5 + $0x20] sm:$0xf]
    %v128 = vld [vmem:[#allocation5 + $0x24] sm:$0xf]
    %v129 = vld [vmem:[#allocation5 + $0x28] sm:$0xf]
    %v130 = vld [vmem:[#allocation5 + $0x2c] sm:$0xf]
    %v131 = vld [vmem:[#allocation5 + $0x30] sm:$0xf]
    %v132 = vld [vmem:[#allocation5 + $0x34] sm:$0xf]
    %v133 = vld [vmem:[#allocation5 + $0x38] sm:$0xf]
    %v134 = vld [vmem:[#allocation5 + $0x3c] sm:$0xf]
    %v135 = vld [vmem:[%s4] sm:$0x1]
    %v137 = vlaneseq
    %v138 = vshrl.u32 %v137, 7
    %v139 = vsub.s32 0, %v138
    %v140 = vrot.slane %v135, %v139
    %v158 = vunpack.c.l.b16 %v119
    %v159 = vunpack.c.l.b16 %v120
    %v160 = vunpack.c.l.b16 %v121
    %v161 = vunpack.c.l.b16 %v122
    %v162 = vunpack.c.l.b16 %v123
    %v163 = vunpack.c.l.b16 %v124
    %v164 = vunpack.c.l.b16 %v125
    %v165 = vunpack.c.l.b16 %v126
    %v166 = vunpack.c.l.b16 %v127
    %v167 = vunpack.c.l.b16 %v128
    %v168 = vunpack.c.l.b16 %v129
    %v169 = vunpack.c.l.b16 %v130
    %v170 = vunpack.c.l.b16 %v131
    %v171 = vunpack.c.l.b16 %v132
    %v172 = vunpack.c.l.b16 %v133
    %v173 = vunpack.c.l.b16 %v134
    %v174 = vpack.c.b16 %v159, %v158
    %v175 = vpack.c.b16 %v161, %v160
    %v176 = vpack.c.b16 %v163, %v162
    %v177 = vpack.c.b16 %v165, %v164
    %v178 = vpack.c.b16 %v167, %v166
    %v179 = vpack.c.b16 %v169, %v168
    %v180 = vpack.c.b16 %v171, %v170
    %v181 = vpack.c.b16 %v173, %v172
    %190 = vmatprep.subr.bf16.mxu0 0
    %191 = vmatpush1.bf16.msra.mxu0 %v181
    %192 = vmatprep.subr.bf16.mxu0 0
    %193 = vmatpush1.bf16.msra.mxu0 %v180
    %194 = vmatprep.subr.bf16.mxu0 0
    %195 = vmatpush1.bf16.msra.mxu0 %v179
    %196 = vmatprep.subr.bf16.mxu0 0
    %197 = vmatpush1.bf16.msra.mxu0 %v178
    %198 = vmatprep.subr.bf16.mxu0 0
    %199 = vmatpush1.bf16.msra.mxu0 %v177
    %200 = vmatprep.subr.bf16.mxu0 0
    %201 = vmatpush1.bf16.msra.mxu0 %v176
    %202 = vmatprep.subr.bf16.mxu0 0
    %203 = vmatpush1.bf16.msra.mxu0 %v175
    %204 = vmatprep.subr.bf16.mxu0 0
    %205 = vmatpush1.bf16.msra.mxu0 %v174
    %206 = vmatprep.subr.bf16.mxu0 0
    %207 = vmatpush2.bf16.msra.mxu0 0
    %208 = vmatprep.subr.bf16.mxu0 0
    %209 = vmatpush2.bf16.msra.mxu0 0
    %210 = vmatprep.subr.bf16.mxu0 0
    %211 = vmatpush2.bf16.msra.mxu0 0
    %212 = vmatprep.subr.bf16.mxu0 0
    %213 = vmatpush2.bf16.msra.mxu0 0
    %214 = vmatprep.subr.bf16.mxu0 0
    %215 = vmatpush2.bf16.msra.mxu0 0
    %216 = vmatprep.subr.bf16.mxu0 0
    %217 = vmatpush2.bf16.msra.mxu0 0
    %218 = vmatprep.subr.bf16.mxu0 0
    %219 = vmatpush2.bf16.msra.mxu0 0
    %220 = vmatprep.subr.bf16.mxu0 0
    %221 = vmatpush2.bf16.msra.mxu0 0
    %222 = vmatprep.mubr.bf16.mxu0 0
    %223 = vmatmul.mubr.bf16.gmra.mxu0 %v118
    %v224 = vpop.f32.mrf.mxu0
    %v225 = vadd.f32 %v140, %v224
    %v226 = vpop.f32.mrf.mxu0
    %v227 = vpop.f32.mrf.mxu0
    %v228 = vadd.f32 %v140, %v227
    %v229 = vpop.f32.mrf.mxu0
    %230 = vdwg.mxu0
    %v231 = vmul.f32 %v225, 0.5
    %v232 = vmul.f32 %v228, 0.5
    %v233 = vmul.f32 %v225, 0.70710677
    %v234 = vmul.f32 %v228, 0.70710677
    %v235 = verf.f32.pop %v233
    %v236 = verf.f32.pop %v234
    %v237 = vadd.f32 %v235, 1.0
    %v238 = vadd.f32 %v236, 1.0
    %v239 = vmul.f32 %v231, %v237
    %v240 = vmul.f32 %v232, %v238
    %v241 = vpack.c.bf16 %v240, %v239
    %v242 = vld [vmem:[#allocation7] sm:$0xf]
    %v243 = vld [vmem:[#allocation7 + $0x4] sm:$0xf]
    %v244 = vld [vmem:[#allocation7 + $0x8] sm:$0xf]
    %v245 = vld [vmem:[#allocation7 + $0xc] sm:$0xf]
    %v246 = vld [vmem:[#allocation7 + $0x10] sm:$0xf]
    %v247 = vld [vmem:[#allocation7 + $0x14] sm:$0xf]
    %v248 = vld [vmem:[#allocation7 + $0x18] sm:$0xf]
    %v249 = vld [vmem:[#allocation7 + $0x1c] sm:$0xf]
    %v250 = vld [vmem:[#allocation7 + $0x20] sm:$0xf]
    %v251 = vld [vmem:[#allocation7 + $0x24] sm:$0xf]
    %v252 = vld [vmem:[#allocation7 + $0x28] sm:$0xf]
    %v253 = vld [vmem:[#allocation7 + $0x2c] sm:$0xf]
    %v254 = vld [vmem:[#allocation7 + $0x30] sm:$0xf]
    %v255 = vld [vmem:[#allocation7 + $0x34] sm:$0xf]
    %v256 = vld [vmem:[#allocation7 + $0x38] sm:$0xf]
    %v257 = vld [vmem:[#allocation7 + $0x3c] sm:$0xf]
    %v258 = vld [vmem:[%s6] sm:$0x1]
    %v260 = vlaneseq
    %v261 = vshrl.u32 %v260, 7
    %v262 = vsub.s32 0, %v261
    %v263 = vrot.slane %v258, %v262
    %v281 = vunpack.c.l.b16 %v242
    %v282 = vunpack.c.l.b16 %v243
    %v283 = vunpack.c.l.b16 %v244
    %v284 = vunpack.c.l.b16 %v245
    %v285 = vunpack.c.l.b16 %v246
    %v286 = vunpack.c.l.b16 %v247
    %v287 = vunpack.c.l.b16 %v248
    %v288 = vunpack.c.l.b16 %v249
    %v289 = vunpack.c.l.b16 %v250
    %v290 = vunpack.c.l.b16 %v251
    %v291 = vunpack.c.l.b16 %v252
    %v292 = vunpack.c.l.b16 %v253
    %v293 = vunpack.c.l.b16 %v254
    %v294 = vunpack.c.l.b16 %v255
    %v295 = vunpack.c.l.b16 %v256
    %v296 = vunpack.c.l.b16 %v257
    %v297 = vpack.c.b16 %v282, %v281
    %v298 = vpack.c.b16 %v284, %v283
    %v299 = vpack.c.b16 %v286, %v285
    %v300 = vpack.c.b16 %v288, %v287
    %v301 = vpack.c.b16 %v290, %v289
    %v302 = vpack.c.b16 %v292, %v291
    %v303 = vpack.c.b16 %v294, %v293
    %v304 = vpack.c.b16 %v296, %v295
    %313 = vmatprep.subr.bf16.mxu0 0
    %314 = vmatpush1.bf16.msra.mxu0 %v304
    %315 = vmatprep.subr.bf16.mxu0 0
    %316 = vmatpush1.bf16.msra.mxu0 %v303
    %317 = vmatprep.subr.bf16.mxu0 0
    %318 = vmatpush1.bf16.msra.mxu0 %v302
    %319 = vmatprep.subr.bf16.mxu0 0
    %320 = vmatpush1.bf16.msra.mxu0 %v301
    %321 = vmatprep.subr.bf16.mxu0 0
    %322 = vmatpush1.bf16.msra.mxu0 %v300
    %323 = vmatprep.subr.bf16.mxu0 0
    %324 = vmatpush1.bf16.msra.mxu0 %v299
    %325 = vmatprep.subr.bf16.mxu0 0
    %326 = vmatpush1.bf16.msra.mxu0 %v298
    %327 = vmatprep.subr.bf16.mxu0 0
    %328 = vmatpush1.bf16.msra.mxu0 %v297
    %329 = vmatprep.subr.bf16.mxu0 0
    %330 = vmatpush2.bf16.msra.mxu0 0
    %331 = vmatprep.subr.bf16.mxu0 0
    %332 = vmatpush2.bf16.msra.mxu0 0
    %333 = vmatprep.subr.bf16.mxu0 0
    %334 = vmatpush2.bf16.msra.mxu0 0
    %335 = vmatprep.subr.bf16.mxu0 0
    %336 = vmatpush2.bf16.msra.mxu0 0
    %337 = vmatprep.subr.bf16.mxu0 0
    %338 = vmatpush2.bf16.msra.mxu0 0
    %339 = vmatprep.subr.bf16.mxu0 0
    %340 = vmatpush2.bf16.msra.mxu0 0
    %341 = vmatprep.subr.bf16.mxu0 0
    %342 = vmatpush2.bf16.msra.mxu0 0
    %343 = vmatprep.subr.bf16.mxu0 0
    %344 = vmatpush2.bf16.msra.mxu0 0
    %345 = vmatprep.mubr.bf16.mxu0 0
    %346 = vmatmul.mubr.bf16.gmra.mxu0 %v241
    %v347 = vpop.f32.mrf.mxu0
    %v348 = vadd.f32 %v263, %v347
    %v349 = vpop.f32.mrf.mxu0
    %v350 = vpop.f32.mrf.mxu0
    %v351 = vadd.f32 %v263, %v350
    %v352 = vpop.f32.mrf.mxu0
    %353 = vdwg.mxu0
    %v354 = vadd.f32 %v348, %v69
    %v355 = vadd.f32 %v351, %v70
    %356 = vst [vmem:[#allocation8] sm:$0xff] %v354
    %357 = vst [vmem:[#allocation8 + $0x8] sm:$0xff] %v355
    // Predicated region
    $region42: #{tpu_custom_call.1} parent=1 // pred_check
      _
    $region43: #{tpu_custom_call.1} parent=1 // pred_check_branch
      %359 = sbr.rel (0) target = $region45
    $region44: #{tpu_custom_call.1} parent=1 // pred_region
      %s361 = ssub.s32 256, 256
      %362 = vsyncadd [#allocation4], %s361
      %s363 = sshll.u32 [#allocation8], 4
      %s364 = int_to_ptr.vmem [resolvable:$true] %s363
      %369 = dma.vmem_to_hbm [thread:$0]  %s364, 256, %s7, [#allocation4], 128, 128, 8
    $region45: #{tpu_custom_call.1} parent=1 // pred_fallthru
      _
    // Predicated region
    $region46: #{tpu_custom_call.1} parent=1 // pred_check
      _
    $region47: #{tpu_custom_call.1} parent=1 // pred_check_branch
      %371 = sbr.rel (0) target = $region49
    $region48: #{tpu_custom_call.1} parent=1 // pred_region
      %372 = dma.done [#allocation4], 256
    $region49: #{tpu_custom_call.1} parent=1 // pred_fallthru
      _
    %373 = vsyncpa [#allocation3], 1
    %374 = vsyncpa [#allocation6], 1
    %375 = vsyncpa [#allocation4], 1

</llo_original>
